<compile_context>
chip_gen: v7x
topology: tpu7x:2x2x1
jax: 0.10.0
libtpu: 0.0.40
codegen_flags: <defaults>
</compile_context>

<pallas_src>
import functools

import jax
import jax.numpy as jnp
from jax.experimental import pallas as pl
from jax.experimental.pallas import tpu as pltpu


# ----------------------------------------------------------------------------
# Kernel 1: masked mean pooling + L2 normalize, streamed over (rows, seq).
# ----------------------------------------------------------------------------
def _pool_normalize_kernel(hidden_ref, mask_ref, embeds_ref, sum_ref, cnt_ref):
    k = pl.program_id(1)

    @pl.when(k == 0)
    def _init():
        sum_ref[...] = jnp.zeros_like(sum_ref)
        cnt_ref[...] = jnp.zeros_like(cnt_ref)

    # Upcast streamed tiles right after the load (v5e has no bf16 VALU) and
    # accumulate in f32 on every chip for accuracy.
    h = hidden_ref[...].astype(jnp.float32)            # [tn, tl, H]
    m = mask_ref[...].astype(jnp.float32)              # [tn, tl, 1]
    sum_ref[...] += jnp.sum(h * m, axis=1)             # [tn, H]
    cnt_ref[...] += jnp.sum(m, axis=1)                 # [tn, 1]

    @pl.when(k == pl.num_programs(1) - 1)
    def _finalize():
        counts = jnp.maximum(cnt_ref[...], 1.0)        # guard fully-masked rows
        pooled = sum_ref[...] * pl.reciprocal(counts, approx=False)  # EUP slot
        sq = jnp.sum(pooled * pooled, axis=-1, keepdims=True)
        inv_norm = jax.lax.rsqrt(jnp.maximum(sq, 1e-24))
        embeds_ref[...] = (pooled * inv_norm).astype(embeds_ref.dtype)


# ----------------------------------------------------------------------------
# Kernel 2: contrastive scores + cross-entropy (tiny epilogue).
# ----------------------------------------------------------------------------
def _scores_ce_kernel(q_ref, p_ref, scores_ref, loss_ref, *, n_passages, inv_t):
    q = q_ref[...]                                     # [B, H] f32
    p = p_ref[...]                                     # [P, H] f32
    # Contract on H for both operands (no in-kernel transpose needed).
    scores = jax.lax.dot_general(
        q, p, dimension_numbers=(((1,), (1,)), ((), ())),
        preferred_element_type=jnp.float32) * inv_t    # [B, P]
    scores_ref[...] = scores

    # Cross entropy (mean) with labels = arange(B) * n_passages.
    B, P = scores.shape
    col = jax.lax.broadcasted_iota(jnp.int32, (B, P), 1)
    lbl = jax.lax.broadcasted_iota(jnp.int32, (B, P), 0) * n_passages
    onehot = (col == lbl).astype(jnp.float32)
    row_max = jnp.max(scores, axis=-1, keepdims=True)
    lse = row_max + jnp.log(jnp.sum(jnp.exp(scores - row_max), axis=-1, keepdims=True))
    tgt = jnp.sum(scores * onehot, axis=-1, keepdims=True)
    loss_ref[0, 0] = jnp.sum(lse - tgt) * (1.0 / B)


# ----------------------------------------------------------------------------
# Tile sizing helpers.
# ----------------------------------------------------------------------------
def _largest_tile(dim, limit, multiple):
    """Largest divisor of `dim` that is a multiple of `multiple` and <= limit.
    Falls back to the full extent (always a legal block shape)."""
    limit = max(min(dim, limit), 1)
    best = None
    d = multiple
    while d <= limit:
        if dim % d == 0:
            best = d
        d += multiple
    return best if best is not None else dim


# ----------------------------------------------------------------------------
# Wrapper.
# ----------------------------------------------------------------------------
def biencoder_forward(last_hidden_states, attention_mask, *,
                      batch_size, n_passages, t=0.05,
                      max_rows_per_tile=64, max_seq_per_tile=None,
                      vmem_limit_bytes=48 * 1024 * 1024):
    """Returns dict mirroring BiencoderOutput (loss, q_reps, p_reps, labels, scores)."""
    N, L, H = last_hidden_states.shape
    P = N - batch_size
    assert P == batch_size * n_passages
    h_bytes = last_hidden_states.dtype.itemsize
    m_bytes = attention_mask.dtype.itemsize

    # --- tile sizing (conservative for v7x's 64 MiB VMEM; fine on v5e/v6e) ---
    # Sublane multiples: 8 for 32-bit, 16 for 16-bit, 32 for 8-bit dtypes.
    sub_mult = max(8, 32 // max(h_bytes, 1))
    tile_n = _largest_tile(N, max_rows_per_tile, 8)
    # Keep the double-buffered hidden tile well under the scoped VMEM limit.
    budget_l = max(sub_mult,
                   (vmem_limit_bytes // 3) // max(1, 2 * tile_n * H * h_bytes))
    if max_seq_per_tile is not None:
        budget_l = min(budget_l, max_seq_per_tile)
    tile_l = _largest_tile(L, budget_l, sub_mult)
    grid = (N // tile_n, L // tile_l)

    # Mask stays in its native (narrow/int) dtype on the wire; reshape to
    # [N, L, 1] so the seq axis sits on sublanes and can be tiled.
    mask3d = attention_mask.reshape(N, L, 1)

    pool_cost = pl.CostEstimate(
        flops=int(2 * N * L * H + 4 * N * H),
        transcendentals=int(2 * N),
        bytes_accessed=int(N * L * H * h_bytes + N * L * m_bytes + N * H * 4),
    )

    embeds = pl.pallas_call(
        _pool_normalize_kernel,
        out_shape=jax.ShapeDtypeStruct((N, H), jnp.float32),
        grid_spec=pltpu.PrefetchScalarGridSpec(
            num_scalar_prefetch=0,
            grid=grid,
            in_specs=[
                pl.BlockSpec((tile_n, tile_l, H), lambda i, k: (i, k, 0)),
                pl.BlockSpec((tile_n, tile_l, 1), lambda i, k: (i, k, 0)),
            ],
            out_specs=pl.BlockSpec((tile_n, H), lambda i, k: (i, 0)),
            scratch_shapes=[
                pltpu.VMEM((tile_n, H), jnp.float32),   # f32 sum accumulator
                pltpu.VMEM((tile_n, 1), jnp.float32),   # f32 token counts
            ],
        ),
        compiler_params=pltpu.CompilerParams(
            dimension_semantics=("parallel", "arbitrary"),
            vmem_limit_bytes=vmem_limit_bytes,
        ),
        cost_estimate=pool_cost,
    )(last_hidden_states, mask3d)

    # Free XLA slices on the lane-dense [N, H] output (no in-kernel row split).
    q_reps = embeds[:batch_size]
    p_reps = embeds[batch_size:]

    # TODO(synk): at production batch sizes, pad B/P to MXU-friendly multiples
    # (128 on v5e, 256 on v6e/v7x) and feed bf16 operands with f32 accumulation.
    scores_kernel = functools.partial(
        _scores_ce_kernel, n_passages=n_passages, inv_t=1.0 / t)
    vmem = pl.BlockSpec(memory_space=pltpu.MemorySpace.VMEM)
    smem = pl.BlockSpec(memory_space=pltpu.MemorySpace.SMEM)
    scores, loss = pl.pallas_call(
        scores_kernel,
        out_shape=(
            jax.ShapeDtypeStruct((batch_size, P), jnp.float32),
            jax.ShapeDtypeStruct((1, 1), jnp.float32),
        ),
        in_specs=[vmem, vmem],
        out_specs=(vmem, smem),
    )(q_reps, p_reps)

    labels = jnp.arange(batch_size, dtype=jnp.int32) * n_passages
    return {
        "loss": loss[0, 0],
        "q_reps": q_reps,
        "p_reps": p_reps,
        "labels": labels,
        "scores": scores,   # world_size == 1 -> total_n_psg == P, slice is identity
    }


# ----------------------------------------------------------------------------
# Pure-JAX reference of the same forward semantics.
# ----------------------------------------------------------------------------
def _reference_forward(last_hidden_states, attention_mask, *,
                       batch_size, n_passages, t=0.05):
    h = last_hidden_states.astype(jnp.float32)
    m = attention_mask.astype(jnp.float32)
    pooled = jnp.sum(h * m[:, :, None], axis=1) / jnp.sum(m, axis=1, keepdims=True)
    embeds = pooled / jnp.linalg.norm(pooled, axis=-1, keepdims=True)
    q, p = embeds[:batch_size], embeds[batch_size:]
    scores = (q @ p.T) / t
    labels = jnp.arange(batch_size) * n_passages
    logp = jax.nn.log_softmax(scores, axis=-1)
    loss = -jnp.mean(logp[jnp.arange(batch_size), labels])
    return loss, q, p, scores


if __name__ == "__main__":
    key = jax.random.PRNGKey(0)

    batch_size = 2        # number of queries
    n_passages = 4        # train_n_passages
    N = batch_size * (1 + n_passages)   # 10 sequences total (queries then passages)
    L = 32                # sequence length
    H = 32                # hidden size
    t = 0.05              # temperature (l2_normalize=True)

    k1, _ = jax.random.split(key)
    # Encoder output stays in its native bf16 on the wire (no wrapper f32 cast).
    hidden = jax.random.normal(k1, (N, L, H), dtype=jnp.float32).astype(jnp.bfloat16)
    # HF-style int attention mask with variable-length valid prefixes (>=1 token),
    # spanning both sequence tiles.
    lengths = (jnp.arange(N) * 3) % L + 1
    mask = (jnp.arange(L)[None, :] < lengths[:, None]).astype(jnp.int32)

    out = biencoder_forward(hidden, mask, batch_size=batch_size,
                            n_passages=n_passages, t=t,
                            max_seq_per_tile=16)  # force a 2-step seq-reduction grid
    jax.block_until_ready(out["loss"])

    ref_loss, ref_q, ref_p, ref_scores = _reference_forward(
        hidden, mask, batch_size=batch_size, n_passages=n_passages, t=t)

    assert jnp.allclose(out["q_reps"], ref_q, atol=1e-5, rtol=1e-5)
    assert jnp.allclose(out["p_reps"], ref_p, atol=1e-5, rtol=1e-5)
    assert jnp.allclose(out["scores"], ref_scores, atol=1e-4, rtol=1e-4)
    assert jnp.allclose(out["loss"], ref_loss, atol=1e-4, rtol=1e-4)

    print("KERNEL_OK")
</pallas_src>

<mosaic_0001>
module attributes {stable_mosaic.version = 11 : i64} {
  func.func @_pool_normalize_kernel(%arg0: i32, %arg1: i32, %arg2: memref<10x16x32xbf16, #tpu.memory_space<vmem>>, %arg3: memref<10x16x1xi32, #tpu.memory_space<vmem>>, %arg4: memref<10x32xf32, #tpu.memory_space<vmem>>, %arg5: memref<10x32xf32, #tpu.memory_space<vmem>>, %arg6: memref<10x1xf32, #tpu.memory_space<vmem>>) attributes {dimension_semantics = [#tpu.dimension_semantics<parallel>, #tpu.dimension_semantics<arbitrary>], iteration_bounds = array<i64: 1, 2>, scalar_prefetch = 0 : i64, scratch_operands = 2 : i64, tpu.core_type = #tpu.core_type<tc>, window_params = [{transform_indices = @transform_0, window_bounds = array<i64: 10, 16, 32>}, {transform_indices = @transform_1, window_bounds = array<i64: 10, 16, 1>}, {transform_indices = @transform_2, window_bounds = array<i64: 10, 32>}]} {
    %c0_i32 = arith.constant 0 : i32
    %0 = arith.cmpi eq, %arg1, %c0_i32 : i32
    %1 = arith.extui %0 : i1 to i32
    %c0_i32_0 = arith.constant 0 : i32
    %2 = arith.cmpi ne, %1, %c0_i32_0 : i32
    scf.if %2 {
      %cst_16 = arith.constant 0.000000e+00 : f32
      %20 = vector.broadcast %cst_16 : f32 to vector<10x32xf32>
      %c0_17 = arith.constant 0 : index
      %c0_18 = arith.constant 0 : index
      %21 = vector.load %arg5[%c0_17, %c0_18] : memref<10x32xf32, #tpu.memory_space<vmem>>, vector<10x32xf32>
      tpu.vector_store %arg5[%c0_17, %c0_18], %20 {strides = array<i32>} : memref<10x32xf32, #tpu.memory_space<vmem>>, vector<10x32xf32>,
      %cst_19 = arith.constant 0.000000e+00 : f32
      %22 = vector.broadcast %cst_19 : f32 to vector<10x1xf32>
      %c0_20 = arith.constant 0 : index
      %c0_21 = arith.constant 0 : index
      %23 = vector.load %arg6[%c0_20, %c0_21] : memref<10x1xf32, #tpu.memory_space<vmem>>, vector<10x1xf32>
      tpu.vector_store %arg6[%c0_20, %c0_21], %22 {strides = array<i32>} : memref<10x1xf32, #tpu.memory_space<vmem>>, vector<10x1xf32>,
    } else {
    }
    %c0 = arith.constant 0 : index
    %c0_1 = arith.constant 0 : index
    %c0_2 = arith.constant 0 : index
    %3 = vector.load %arg2[%c0, %c0_1, %c0_2] : memref<10x16x32xbf16, #tpu.memory_space<vmem>>, vector<10x16x32xbf16>
    %4 = arith.extf %3 : vector<10x16x32xbf16> to vector<10x16x32xf32>
    %c0_3 = arith.constant 0 : index
    %c0_4 = arith.constant 0 : index
    %c0_5 = arith.constant 0 : index
    %5 = vector.load %arg3[%c0_3, %c0_4, %c0_5] : memref<10x16x1xi32, #tpu.memory_space<vmem>>, vector<10x16x1xi32>
    %6 = arith.sitofp %5 : vector<10x16x1xi32> to vector<10x16x1xf32>
    %c0_6 = arith.constant 0 : index
    %c0_7 = arith.constant 0 : index
    %7 = vector.load %arg5[%c0_6, %c0_7] : memref<10x32xf32, #tpu.memory_space<vmem>>, vector<10x32xf32>
    %8 = vector.broadcast %6 : vector<10x16x1xf32> to vector<10x16x32xf32>
    %9 = arith.mulf %4, %8 : vector<10x16x32xf32>
    %cst = arith.constant dense<0.000000e+00> : vector<10x32xf32>
    %10 = vector.multi_reduction <add>, %9, %cst [1] : vector<10x16x32xf32> to vector<10x32xf32>
    %11 = arith.addf %7, %10 : vector<10x32xf32>
    %c0_8 = arith.constant 0 : index
    %c0_9 = arith.constant 0 : index
    %12 = vector.load %arg5[%c0_8, %c0_9] : memref<10x32xf32, #tpu.memory_space<vmem>>, vector<10x32xf32>
    tpu.vector_store %arg5[%c0_8, %c0_9], %11 {strides = array<i32>} : memref<10x32xf32, #tpu.memory_space<vmem>>, vector<10x32xf32>,
    %c0_10 = arith.constant 0 : index
    %c0_11 = arith.constant 0 : index
    %13 = vector.load %arg6[%c0_10, %c0_11] : memref<10x1xf32, #tpu.memory_space<vmem>>, vector<10x1xf32>
    %cst_12 = arith.constant dense<0.000000e+00> : vector<10x1xf32>
    %14 = vector.multi_reduction <add>, %6, %cst_12 [1] : vector<10x16x1xf32> to vector<10x1xf32>
    %15 = arith.addf %13, %14 : vector<10x1xf32>
    %c0_13 = arith.constant 0 : index
    %c0_14 = arith.constant 0 : index
    %16 = vector.load %arg6[%c0_13, %c0_14] : memref<10x1xf32, #tpu.memory_space<vmem>>, vector<10x1xf32>
    tpu.vector_store %arg6[%c0_13, %c0_14], %15 {strides = array<i32>} : memref<10x1xf32, #tpu.memory_space<vmem>>, vector<10x1xf32>,
    %c1_i32 = arith.constant 1 : i32
    %17 = arith.cmpi eq, %arg1, %c1_i32 : i32
    %18 = arith.extui %17 : i1 to i32
    %c0_i32_15 = arith.constant 0 : i32
    %19 = arith.cmpi ne, %18, %c0_i32_15 : i32
    scf.if %19 {
      %c0_16 = arith.constant 0 : index
      %c0_17 = arith.constant 0 : index
      %20 = vector.load %arg6[%c0_16, %c0_17] : memref<10x1xf32, #tpu.memory_space<vmem>>, vector<10x1xf32>
      %cst_18 = arith.constant 1.000000e+00 : f32
      %21 = vector.broadcast %cst_18 : f32 to vector<10x1xf32>
      %22 = arith.maximumf %20, %21 : vector<10x1xf32>
      %c0_19 = arith.constant 0 : index
      %c0_20 = arith.constant 0 : index
      %23 = vector.load %arg5[%c0_19, %c0_20] : memref<10x32xf32, #tpu.memory_space<vmem>>, vector<10x32xf32>
      %24 = tpu.reciprocal %22 : vector<10x1xf32> -> vector<10x1xf32>
      %25 = vector.broadcast %24 : vector<10x1xf32> to vector<10x32xf32>
      %26 = arith.mulf %23, %25 : vector<10x32xf32>
      %27 = arith.mulf %26, %26 : vector<10x32xf32>
      %cst_21 = arith.constant dense<0.000000e+00> : vector<10xf32>
      %28 = vector.multi_reduction <add>, %27, %cst_21 [1] : vector<10x32xf32> to vector<10xf32>
      %29 = vector.shape_cast %28 : vector<10xf32> to vector<10x1xf32>
      %cst_22 = arith.constant 1.000000e-24 : f32
      %30 = vector.broadcast %cst_22 : f32 to vector<10x1xf32>
      %31 = arith.maximumf %29, %30 : vector<10x1xf32>
      %32 = math.rsqrt %31 : vector<10x1xf32>
      %33 = vector.broadcast %32 : vector<10x1xf32> to vector<10x32xf32>
      %34 = arith.mulf %26, %33 : vector<10x32xf32>
      %c0_23 = arith.constant 0 : index
      %c0_24 = arith.constant 0 : index
      %35 = vector.load %arg4[%c0_23, %c0_24] : memref<10x32xf32, #tpu.memory_space<vmem>>, vector<10x32xf32>
      tpu.vector_store %arg4[%c0_23, %c0_24], %34 {strides = array<i32>} : memref<10x32xf32, #tpu.memory_space<vmem>>, vector<10x32xf32>,
    } else {
    }
    return
  }
  func.func @transform_0(%arg0: i32, %arg1: i32) -> (i32, i32, i32) {
    %c0_i32 = arith.constant 0 : i32
    %c0_i32_0 = arith.constant 0 : i32
    return %arg0, %arg1, %c0_i32 : i32, i32, i32
  }
  func.func @transform_1(%arg0: i32, %arg1: i32) -> (i32, i32, i32) {
    %c0_i32 = arith.constant 0 : i32
    %c0_i32_0 = arith.constant 0 : i32
    return %arg0, %arg1, %c0_i32 : i32, i32, i32
  }
  func.func @transform_2(%arg0: i32, %arg1: i32) -> (i32, i32) {
    %c0_i32 = arith.constant 0 : i32
    %c0_i32_0 = arith.constant 0 : i32
    return %arg0, %c0_i32 : i32, i32
  }
}

</mosaic_0001>

<llo_original>
// kernel: tpu_custom_call.1
$region0: #{tpu_custom_call.1}
  #allocation0 [shape = 'u32[]', space=smem, size = 0x4, offset = 0x4, fixed_abs, tag = 'smem constant byte address 0x4 - core index']
  #allocation1 [shape = 'u32[144,128]{1,0:T(1,128)}', space=vmem, size = 0x12000, scoped, tag = 'internal scratch']
  #allocation2 [shape = 'f32[10,32]{1,0:T(8,128)}', space=vmem, size = 0x2000, scoped, tag = 'scratch operand']
  #allocation3 [shape = 'f32[10,1]{1,0:T(8,128)}', space=vmem, size = 0x2000, scoped, tag = 'scratch operand']
  %s0 = inlined_call_operand.vmem [shape: bf16[10,32,32], index: 0, kind: input, shape index: {}]
  %s1 = inlined_call_operand.vmem [shape: s32[10,32,1], index: 1, kind: input, shape index: {}]
  %s2 = inlined_call_operand.hbm [shape: f32[10,32], index: 2, kind: output, shape index: {}]
  %s3 = sld [smem:[#allocation0]]
  $region128: #{tpu_custom_call.1} parent=0
    _
  %s5 = ssub.s32 1, %s3
  %s6 = scalar_select 0, %s5, %s3
  $region1: #{tpu_custom_call.1} parent=0
    #allocation4 [shape = 'u8[81920]{0}', space=vmem, size = 0x14000, scoped, tag = 'input window, operand 0']
    #allocation5 [shape = 'u8[163840]{0}', space=vmem, size = 0x28000, scoped, tag = 'input window, operand 1']
    #allocation6 [shape = 'u8[8192]{0}', space=vmem, size = 0x2000, scoped, tag = 'output window, operand 0, single buffered']
    #allocation7 [shape = 's32[2]{0}', space=sflag, size = 0x8, scoped, tag = 'scoped memory for tpu_custom_call.1']
    %7 = vsyncpa [#allocation7], 0
    loop: start=0, step=1, limit=4
    $region2: #{tpu_custom_call.1} parent=1 // loop_pre_header
      _
    $region3: #{tpu_custom_call.1} parent=1 // loop_header
      %s9 = sphi 0, %s13
      %p10 = scmp.ge.s32.totalorder %s9, 4
      %s16 = sphi 0, %s28
      %s17 = sphi 0, %s24
      %s18 = sphi 0, %s16
      %s19 = sphi 0, %s17
      %s20 = sphi 0, %s18
      %s21 = sphi 0, %s19
      %s33 = sphi 0, %s35
      %s36 = sphi 0, %s33
      %s37 = sphi 0, %s36
      %s53 = sphi 0, %s37
      %s61 = sphi 0, %s63
      %s64 = sphi 0, %s61
      %s65 = sphi 0, %s64
      %s81 = sphi 0, %s65
      %s87 = sphi 0, %s89
      %s90 = sphi 0, %s87
      %s91 = sphi 0, %s90
      %s107 = sphi 0, %s91
    $region4: #{tpu_custom_call.1} parent=1 // loop_header_branch
      %12 = sbr.rel (%p10) target = $region8
    $region5: #{tpu_custom_call.1} parent=1 // loop_body
      %s14 = ssub.s32 %s9, 1
      %s15 = ssub.s32 %s9, 2
      %s22 = sadd.s32 1, %s17
      %p23 = scmp.ge.s32.totalorder %s22, 2
      %s24 = scalar_select %p23, 0, %s22
      %s25 = sadd.s32 1, %s16
      %s26 = scalar_select %p23, %s25, %s16
      %p27 = scmp.ge.s32.totalorder %s26, 1
      %s28 = scalar_select %p27, 0, %s26
      %s29 = ssub.s32 %s16, %s28
      %s30 = ssub.s32 %s17, %s24
      %s31 = sor.u32 %s29, %s30
      %p32 = scmp.eq.s32.totalorder %s31, 0
      %s34 = sadd.s32 %s33, 1
      %s35 = scalar_select %p32, %s33, %s34
      %p38 = pneg %p32
      %p39 = scmp.eq.s32.totalorder %s9, 1
      %p40 = por %p38, %p39
      %p41 = scmp.ne.s32.totalorder %s33, %s36
      %p42 = scmp.eq.s32.totalorder %s9, 0
      %p43 = por %p41, %p42
      %p44 = scmp.ne.s32.totalorder %s33, %s36
      %p45 = scmp.eq.s32.totalorder %s14, 1
      %p46 = por %p44, %p45
      %p47 = scmp.ne.s32.totalorder %s36, %s37
      %p48 = scmp.eq.s32.totalorder %s14, 0
      %p49 = por %p47, %p48
      %p50 = scmp.ne.s32.totalorder %s36, %s37
      %p51 = scmp.eq.s32.totalorder %s15, 1
      %p52 = por %p50, %p51
      %p54 = scmp.ne.s32.totalorder %s37, %s53
      %p55 = scmp.eq.s32.totalorder %s15, 0
      %p56 = por %p54, %p55
      %s57 = ssub.s32 %s16, %s28
      %s58 = ssub.s32 %s17, %s24
      %s59 = sor.u32 %s57, %s58
      %p60 = scmp.eq.s32.totalorder %s59, 0
      %s62 = sadd.s32 %s61, 1
      %s63 = scalar_select %p60, %s61, %s62
      %p66 = pneg %p60
      %p67 = scmp.eq.s32.totalorder %s9, 1
      %p68 = por %p66, %p67
      %p69 = scmp.ne.s32.totalorder %s61, %s64
      %p70 = scmp.eq.s32.totalorder %s9, 0
      %p71 = por %p69, %p70
      %p72 = scmp.ne.s32.totalorder %s61, %s64
      %p73 = scmp.eq.s32.totalorder %s14, 1
      %p74 = por %p72, %p73
      %p75 = scmp.ne.s32.totalorder %s64, %s65
      %p76 = scmp.eq.s32.totalorder %s14, 0
      %p77 = por %p75, %p76
      %p78 = scmp.ne.s32.totalorder %s64, %s65
      %p79 = scmp.eq.s32.totalorder %s15, 1
      %p80 = por %p78, %p79
      %p82 = scmp.ne.s32.totalorder %s65, %s81
      %p83 = scmp.eq.s32.totalorder %s15, 0
      %p84 = por %p82, %p83
      %s85 = ssub.s32 %s16, %s28
      %p86 = scmp.eq.s32.totalorder %s85, 0
      %s88 = sadd.s32 %s87, 1
      %s89 = scalar_select %p86, %s87, %s88
      %p92 = pneg %p86
      %p93 = scmp.eq.s32.totalorder %s9, 1
      %p94 = por %p92, %p93
      %p95 = scmp.ne.s32.totalorder %s87, %s90
      %p96 = scmp.eq.s32.totalorder %s9, 0
      %p97 = por %p95, %p96
      %p98 = scmp.ne.s32.totalorder %s87, %s90
      %p99 = scmp.eq.s32.totalorder %s14, 1
      %p100 = por %p98, %p99
      %p101 = scmp.ne.s32.totalorder %s90, %s91
      %p102 = scmp.eq.s32.totalorder %s14, 0
      %p103 = por %p101, %p102
      %p104 = scmp.ne.s32.totalorder %s90, %s91
      %p105 = scmp.eq.s32.totalorder %s15, 1
      %p106 = por %p104, %p105
      %p108 = scmp.ne.s32.totalorder %s91, %s107
      %p109 = scmp.eq.s32.totalorder %s15, 0
      %p110 = por %p108, %p109
      %p111 = scmp.le.s32.totalorder 1, %s9
      %p112 = scmp.lt.s32.totalorder %s9, 3
      %p113 = pnand %p111, %p112
      %p114 = pneg %p113
      // Predicated region
      $region9: #{tpu_custom_call.1} parent=5 // pred_check
        _
      $region10: #{tpu_custom_call.1} parent=5 // pred_check_branch
        %116 = sbr.rel (%p113) target = $region12
      $region11: #{tpu_custom_call.1} parent=5 // pred_region
        %s117 = ssub.s32 %s9, 1
      $region12: #{tpu_custom_call.1} parent=5 // pred_fallthru
        _
      %p118 = scmp.lt.s32.totalorder %s9, 2
      // Predicated region
      $region13: #{tpu_custom_call.1} parent=5 // pred_check
        %p119 = pneg %p118
      $region14: #{tpu_custom_call.1} parent=5 // pred_check_branch
        %121 = sbr.rel (%p119) target = $region16
      $region15: #{tpu_custom_call.1} parent=5 // pred_region
        // Predicated region
        $region17: #{tpu_custom_call.1} parent=15 // pred_check
          %p122 = pneg %p43
        $region18: #{tpu_custom_call.1} parent=15 // pred_check_branch
          %124 = sbr.rel (%p122) target = $region20
        $region19: #{tpu_custom_call.1} parent=15 // pred_region
          %s125 = sand.u32 %s33, 1
          %s126 = sand.u32 %s33, 1
          %s127 = smul.addr %s126, 80
          %s128 = scalar_lea.vmem [#allocation4], %s127
          %s129 = smul.u32 10, %s16
          %s130 = smul.u32 2, %s17
          %s131 = smul.addr %s129, 4
          %s132 = sadd.s32 %s130, %s131
          %s133 = smul.addr %s132, 4
          %s134 = scalar_lea.vmem %s0, %s133
          // Predicated region
          $region21: #{tpu_custom_call.1} parent=19 // pred_check
            _
          $region22: #{tpu_custom_call.1} parent=19 // pred_check_branch
            %136 = sbr.rel (0) target = $region24
          $region23: #{tpu_custom_call.1} parent=19 // pred_region
            // Predicated region
            $region25: #{tpu_custom_call.1} parent=23 // pred_check
              _
            $region26: #{tpu_custom_call.1} parent=23 // pred_check_branch
              %138 = sbr.rel target = $region28
            $region27: #{tpu_custom_call.1} parent=23 // pred_region
              // Predicated region
              $region40: #{tpu_custom_call.1} parent=27 // pred_check
                _
              $region41: #{tpu_custom_call.1} parent=27 // pred_check_branch
                %191 = sbr.rel (0) target = $region43
              $region42: #{tpu_custom_call.1} parent=27 // pred_region
                loop: start=0, step=1, limit=1
                $region44: #{tpu_custom_call.1} parent=42 // loop_pre_header
                  _
                $region45: #{tpu_custom_call.1} parent=42 // loop_header
                  %s193 = sphi 0, %s197
                  %p194 = scmp.ge.s32.totalorder %s193, 1
                  %s198 = sphi %s134, %s134
                  %s199 = sphi %s128, %s128
                $region46: #{tpu_custom_call.1} parent=42 // loop_header_branch
                  %196 = sbr.rel (%p194) target = $region50
                $region47: #{tpu_custom_call.1} parent=42 // loop_body
                  _
                $region48: #{tpu_custom_call.1} parent=42 // loop_footer
                  %s197 = sadd.s32 1, %s193
                $region49: #{tpu_custom_call.1} parent=42 // loop_footer_branch
                  %192 = sbr.rel target = $region45
                $region50: #{tpu_custom_call.1} parent=42 // loop_exit
                  _
                loop: start=0, step=1, limit=1
                $region51: #{tpu_custom_call.1} parent=42 // loop_pre_header
                  _
                $region52: #{tpu_custom_call.1} parent=42 // loop_header
                  %s202 = sphi 0, %s206
                  %p203 = scmp.ge.s32.totalorder %s202, 1
                  %s207 = sphi %s134, %s134
                  %s208 = sphi %s128, %s128
                $region53: #{tpu_custom_call.1} parent=42 // loop_header_branch
                  %205 = sbr.rel (%p203) target = $region57
                $region54: #{tpu_custom_call.1} parent=42 // loop_body
                  %v209 = vld [vmem:[%s207] sm:$0xf]
                  %210 = vst [vmem:[%s208] sm:$0xf] %v209
                  %v211 = vld [vmem:[%s207 + $0x4] sm:$0xf]
                  %212 = vst [vmem:[%s208 + $0x4] sm:$0xf] %v211
                  %v213 = vld [vmem:[%s207 + $0x10] sm:$0xf]
                  %214 = vst [vmem:[%s208 + $0x8] sm:$0xf] %v213
                  %v215 = vld [vmem:[%s207 + $0x14] sm:$0xf]
                  %216 = vst [vmem:[%s208 + $0xc] sm:$0xf] %v215
                  %v217 = vld [vmem:[%s207 + $0x20] sm:$0xf]
                  %218 = vst [vmem:[%s208 + $0x10] sm:$0xf] %v217
                  %v219 = vld [vmem:[%s207 + $0x24] sm:$0xf]
                  %220 = vst [vmem:[%s208 + $0x14] sm:$0xf] %v219
                  %v221 = vld [vmem:[%s207 + $0x30] sm:$0xf]
                  %222 = vst [vmem:[%s208 + $0x18] sm:$0xf] %v221
                  %v223 = vld [vmem:[%s207 + $0x34] sm:$0xf]
                  %224 = vst [vmem:[%s208 + $0x1c] sm:$0xf] %v223
                  %v225 = vld [vmem:[%s207 + $0x40] sm:$0xf]
                  %226 = vst [vmem:[%s208 + $0x20] sm:$0xf] %v225
                  %v227 = vld [vmem:[%s207 + $0x44] sm:$0xf]
                  %228 = vst [vmem:[%s208 + $0x24] sm:$0xf] %v227
                  %v229 = vld [vmem:[%s207 + $0x50] sm:$0xf]
                  %230 = vst [vmem:[%s208 + $0x28] sm:$0xf] %v229
                  %v231 = vld [vmem:[%s207 + $0x54] sm:$0xf]
                  %232 = vst [vmem:[%s208 + $0x2c] sm:$0xf] %v231
                  %v233 = vld [vmem:[%s207 + $0x60] sm:$0xf]
                  %234 = vst [vmem:[%s208 + $0x30] sm:$0xf] %v233
                  %v235 = vld [vmem:[%s207 + $0x64] sm:$0xf]
                  %236 = vst [vmem:[%s208 + $0x34] sm:$0xf] %v235
                  %v237 = vld [vmem:[%s207 + $0x70] sm:$0xf]
                  %238 = vst [vmem:[%s208 + $0x38] sm:$0xf] %v237
                  %v239 = vld [vmem:[%s207 + $0x74] sm:$0xf]
                  %240 = vst [vmem:[%s208 + $0x3c] sm:$0xf] %v239
                  %v241 = vld [vmem:[%s207 + $0x80] sm:$0xf]
                  %242 = vst [vmem:[%s208 + $0x40] sm:$0xf] %v241
                  %v243 = vld [vmem:[%s207 + $0x84] sm:$0xf]
                  %244 = vst [vmem:[%s208 + $0x44] sm:$0xf] %v243
                  %v245 = vld [vmem:[%s207 + $0x90] sm:$0xf]
                  %246 = vst [vmem:[%s208 + $0x48] sm:$0xf] %v245
                  %v247 = vld [vmem:[%s207 + $0x94] sm:$0xf]
                  %248 = vst [vmem:[%s208 + $0x4c] sm:$0xf] %v247
                $region55: #{tpu_custom_call.1} parent=42 // loop_footer
                  %s206 = sadd.s32 1, %s202
                $region56: #{tpu_custom_call.1} parent=42 // loop_footer_branch
                  %201 = sbr.rel target = $region52
                $region57: #{tpu_custom_call.1} parent=42 // loop_exit
                  _
              $region43: #{tpu_custom_call.1} parent=27 // pred_fallthru
                _
            $region28: #{tpu_custom_call.1} parent=23 // pred_fallthru
              _
            // Predicated region
            $region29: #{tpu_custom_call.1} parent=23 // pred_check
              _
            $region30: #{tpu_custom_call.1} parent=23 // pred_check_branch
              %140 = sbr.rel (0) target = $region32
            $region31: #{tpu_custom_call.1} parent=23 // pred_region
              loop: start=0, step=1, limit=1
              $region33: #{tpu_custom_call.1} parent=31 // loop_pre_header
                _
              $region34: #{tpu_custom_call.1} parent=31 // loop_header
                %s143 = sphi 0, %s147
                %p144 = scmp.ge.s32.totalorder %s143, 1
                %s148 = sphi %s134, %s134
                %s149 = sphi %s128, %s128
              $region35: #{tpu_custom_call.1} parent=31 // loop_header_branch
                %146 = sbr.rel (%p144) target = $region39
              $region36: #{tpu_custom_call.1} parent=31 // loop_body
                %v150 = vld [vmem:[%s148] sm:$0xf]
                %151 = vst [vmem:[%s149] sm:$0xf] %v150
                %v152 = vld [vmem:[%s148 + $0x4] sm:$0xf]
                %153 = vst [vmem:[%s149 + $0x4] sm:$0xf] %v152
                %v154 = vld [vmem:[%s148 + $0x10] sm:$0xf]
                %155 = vst [vmem:[%s149 + $0x8] sm:$0xf] %v154
                %v156 = vld [vmem:[%s148 + $0x14] sm:$0xf]
                %157 = vst [vmem:[%s149 + $0xc] sm:$0xf] %v156
                %v158 = vld [vmem:[%s148 + $0x20] sm:$0xf]
                %159 = vst [vmem:[%s149 + $0x10] sm:$0xf] %v158
                %v160 = vld [vmem:[%s148 + $0x24] sm:$0xf]
                %161 = vst [vmem:[%s149 + $0x14] sm:$0xf] %v160
                %v162 = vld [vmem:[%s148 + $0x30] sm:$0xf]
                %163 = vst [vmem:[%s149 + $0x18] sm:$0xf] %v162
                %v164 = vld [vmem:[%s148 + $0x34] sm:$0xf]
                %165 = vst [vmem:[%s149 + $0x1c] sm:$0xf] %v164
                %v166 = vld [vmem:[%s148 + $0x40] sm:$0xf]
                %167 = vst [vmem:[%s149 + $0x20] sm:$0xf] %v166
                %v168 = vld [vmem:[%s148 + $0x44] sm:$0xf]
                %169 = vst [vmem:[%s149 + $0x24] sm:$0xf] %v168
                %v170 = vld [vmem:[%s148 + $0x50] sm:$0xf]
                %171 = vst [vmem:[%s149 + $0x28] sm:$0xf] %v170
                %v172 = vld [vmem:[%s148 + $0x54] sm:$0xf]
                %173 = vst [vmem:[%s149 + $0x2c] sm:$0xf] %v172
                %v174 = vld [vmem:[%s148 + $0x60] sm:$0xf]
                %175 = vst [vmem:[%s149 + $0x30] sm:$0xf] %v174
                %v176 = vld [vmem:[%s148 + $0x64] sm:$0xf]
                %177 = vst [vmem:[%s149 + $0x34] sm:$0xf] %v176
                %v178 = vld [vmem:[%s148 + $0x70] sm:$0xf]
                %179 = vst [vmem:[%s149 + $0x38] sm:$0xf] %v178
                %v180 = vld [vmem:[%s148 + $0x74] sm:$0xf]
                %181 = vst [vmem:[%s149 + $0x3c] sm:$0xf] %v180
                %v182 = vld [vmem:[%s148 + $0x80] sm:$0xf]
                %183 = vst [vmem:[%s149 + $0x40] sm:$0xf] %v182
                %v184 = vld [vmem:[%s148 + $0x84] sm:$0xf]
                %185 = vst [vmem:[%s149 + $0x44] sm:$0xf] %v184
                %v186 = vld [vmem:[%s148 + $0x90] sm:$0xf]
                %187 = vst [vmem:[%s149 + $0x48] sm:$0xf] %v186
                %v188 = vld [vmem:[%s148 + $0x94] sm:$0xf]
                %189 = vst [vmem:[%s149 + $0x4c] sm:$0xf] %v188
              $region37: #{tpu_custom_call.1} parent=31 // loop_footer
                %s147 = sadd.s32 1, %s143
              $region38: #{tpu_custom_call.1} parent=31 // loop_footer_branch
                %142 = sbr.rel target = $region34
              $region39: #{tpu_custom_call.1} parent=31 // loop_exit
                _
            $region32: #{tpu_custom_call.1} parent=23 // pred_fallthru
              _
          $region24: #{tpu_custom_call.1} parent=19 // pred_fallthru
            _
          %249 = vnop
        $region20: #{tpu_custom_call.1} parent=15 // pred_fallthru
          _
        // Predicated region
        $region58: #{tpu_custom_call.1} parent=15 // pred_check
          %p250 = pneg %p71
        $region59: #{tpu_custom_call.1} parent=15 // pred_check_branch
          %252 = sbr.rel (%p250) target = $region61
        $region60: #{tpu_custom_call.1} parent=15 // pred_region
          %s253 = sand.u32 %s61, 1
          %s254 = sand.u32 %s61, 1
          %s255 = smul.addr %s254, 160
          %s256 = scalar_lea.vmem [#allocation5], %s255
          %s257 = smul.u32 10, %s16
          %s258 = smul.u32 2, %s17
          %s259 = smul.addr %s257, 4
          %s260 = sadd.s32 %s258, %s259
          %s261 = smul.addr %s260, 8
          %s262 = scalar_lea.vmem %s1, %s261
          // Predicated region
          $region62: #{tpu_custom_call.1} parent=60 // pred_check
            _
          $region63: #{tpu_custom_call.1} parent=60 // pred_check_branch
            %264 = sbr.rel (0) target = $region65
          $region64: #{tpu_custom_call.1} parent=60 // pred_region
            // Predicated region
            $region66: #{tpu_custom_call.1} parent=64 // pred_check
              _
            $region67: #{tpu_custom_call.1} parent=64 // pred_check_branch
              %266 = sbr.rel (0) target = $region69
            $region68: #{tpu_custom_call.1} parent=64 // pred_region
              // Predicated region
              $region81: #{tpu_custom_call.1} parent=68 // pred_check
                _
              $region82: #{tpu_custom_call.1} parent=68 // pred_check_branch
                %319 = sbr.rel (0) target = $region84
              $region83: #{tpu_custom_call.1} parent=68 // pred_region
                loop: start=0, step=1, limit=1
                $region85: #{tpu_custom_call.1} parent=83 // loop_pre_header
                  _
                $region86: #{tpu_custom_call.1} parent=83 // loop_header
                  %s321 = sphi 0, %s325
                  %p322 = scmp.ge.s32.totalorder %s321, 1
                  %s326 = sphi %s262, %s262
                  %s327 = sphi %s256, %s256
                $region87: #{tpu_custom_call.1} parent=83 // loop_header_branch
                  %324 = sbr.rel (%p322) target = $region91
                $region88: #{tpu_custom_call.1} parent=83 // loop_body
                  %v328 = vld [vmem:[%s326] sm:$0xff]
                  %329 = vst [vmem:[%s327] sm:$0xff] %v328
                  %v330 = vld [vmem:[%s326 + $0x8] sm:$0xff]
                  %331 = vst [vmem:[%s327 + $0x8] sm:$0xff] %v330
                  %v332 = vld [vmem:[%s326 + $0x20] sm:$0xff]
                  %333 = vst [vmem:[%s327 + $0x10] sm:$0xff] %v332
                  %v334 = vld [vmem:[%s326 + $0x28] sm:$0xff]
                  %335 = vst [vmem:[%s327 + $0x18] sm:$0xff] %v334
                  %v336 = vld [vmem:[%s326 + $0x40] sm:$0xff]
                  %337 = vst [vmem:[%s327 + $0x20] sm:$0xff] %v336
                  %v338 = vld [vmem:[%s326 + $0x48] sm:$0xff]
                  %339 = vst [vmem:[%s327 + $0x28] sm:$0xff] %v338
                  %v340 = vld [vmem:[%s326 + $0x60] sm:$0xff]
                  %341 = vst [vmem:[%s327 + $0x30] sm:$0xff] %v340
                  %v342 = vld [vmem:[%s326 + $0x68] sm:$0xff]
                  %343 = vst [vmem:[%s327 + $0x38] sm:$0xff] %v342
                  %v344 = vld [vmem:[%s326 + $0x80] sm:$0xff]
                  %345 = vst [vmem:[%s327 + $0x40] sm:$0xff] %v344
                  %v346 = vld [vmem:[%s326 + $0x88] sm:$0xff]
                  %347 = vst [vmem:[%s327 + $0x48] sm:$0xff] %v346
                  %v348 = vld [vmem:[%s326 + $0xa0] sm:$0xff]
                  %349 = vst [vmem:[%s327 + $0x50] sm:$0xff] %v348
                  %v350 = vld [vmem:[%s326 + $0xa8] sm:$0xff]
                  %351 = vst [vmem:[%s327 + $0x58] sm:$0xff] %v350
                  %v352 = vld [vmem:[%s326 + $0xc0] sm:$0xff]
                  %353 = vst [vmem:[%s327 + $0x60] sm:$0xff] %v352
                  %v354 = vld [vmem:[%s326 + $0xc8] sm:$0xff]
                  %355 = vst [vmem:[%s327 + $0x68] sm:$0xff] %v354
                  %v356 = vld [vmem:[%s326 + $0xe0] sm:$0xff]
                  %357 = vst [vmem:[%s327 + $0x70] sm:$0xff] %v356
                  %v358 = vld [vmem:[%s326 + $0xe8] sm:$0xff]
                  %359 = vst [vmem:[%s327 + $0x78] sm:$0xff] %v358
                  %v360 = vld [vmem:[%s326 + $0x100] sm:$0xff]
                  %361 = vst [vmem:[%s327 + $0x80] sm:$0xff] %v360
                  %v362 = vld [vmem:[%s326 + $0x108] sm:$0xff]
                  %363 = vst [vmem:[%s327 + $0x88] sm:$0xff] %v362
                  %v364 = vld [vmem:[%s326 + $0x120] sm:$0xff]
                  %365 = vst [vmem:[%s327 + $0x90] sm:$0xff] %v364
                  %v366 = vld [vmem:[%s326 + $0x128] sm:$0xff]
                  %367 = vst [vmem:[%s327 + $0x98] sm:$0xff] %v366
                $region89: #{tpu_custom_call.1} parent=83 // loop_footer
                  %s325 = sadd.s32 1, %s321
                $region90: #{tpu_custom_call.1} parent=83 // loop_footer_branch
                  %320 = sbr.rel target = $region86
                $region91: #{tpu_custom_call.1} parent=83 // loop_exit
                  _
              $region84: #{tpu_custom_call.1} parent=68 // pred_fallthru
                _
              // Predicated region
              $region92: #{tpu_custom_call.1} parent=68 // pred_check
                _
              $region93: #{tpu_custom_call.1} parent=68 // pred_check_branch
                %369 = sbr.rel target = $region95
              $region94: #{tpu_custom_call.1} parent=68 // pred_region
                _
              $region95: #{tpu_custom_call.1} parent=68 // pred_fallthru
                _
            $region69: #{tpu_custom_call.1} parent=64 // pred_fallthru
              _
            // Predicated region
            $region70: #{tpu_custom_call.1} parent=64 // pred_check
              _
            $region71: #{tpu_custom_call.1} parent=64 // pred_check_branch
              %268 = sbr.rel target = $region73
            $region72: #{tpu_custom_call.1} parent=64 // pred_region
              loop: start=0, step=1, limit=1
              $region74: #{tpu_custom_call.1} parent=72 // loop_pre_header
                _
              $region75: #{tpu_custom_call.1} parent=72 // loop_header
                %s271 = sphi 0, %s275
                %p272 = scmp.ge.s32.totalorder %s271, 1
                %s276 = sphi %s262, %s262
                %s277 = sphi %s256, %s256
              $region76: #{tpu_custom_call.1} parent=72 // loop_header_branch
                %274 = sbr.rel (%p272) target = $region80
              $region77: #{tpu_custom_call.1} parent=72 // loop_body
                %v278 = vld [vmem:[%s276] sm:$0xff]
                %279 = vst [vmem:[%s277] sm:$0xff] %v278
                %v280 = vld [vmem:[%s276 + $0x8] sm:$0xff]
                %281 = vst [vmem:[%s277 + $0x8] sm:$0xff] %v280
                %v282 = vld [vmem:[%s276 + $0x20] sm:$0xff]
                %283 = vst [vmem:[%s277 + $0x10] sm:$0xff] %v282
                %v284 = vld [vmem:[%s276 + $0x28] sm:$0xff]
                %285 = vst [vmem:[%s277 + $0x18] sm:$0xff] %v284
                %v286 = vld [vmem:[%s276 + $0x40] sm:$0xff]
                %287 = vst [vmem:[%s277 + $0x20] sm:$0xff] %v286
                %v288 = vld [vmem:[%s276 + $0x48] sm:$0xff]
                %289 = vst [vmem:[%s277 + $0x28] sm:$0xff] %v288
                %v290 = vld [vmem:[%s276 + $0x60] sm:$0xff]
                %291 = vst [vmem:[%s277 + $0x30] sm:$0xff] %v290
                %v292 = vld [vmem:[%s276 + $0x68] sm:$0xff]
                %293 = vst [vmem:[%s277 + $0x38] sm:$0xff] %v292
                %v294 = vld [vmem:[%s276 + $0x80] sm:$0xff]
                %295 = vst [vmem:[%s277 + $0x40] sm:$0xff] %v294
                %v296 = vld [vmem:[%s276 + $0x88] sm:$0xff]
                %297 = vst [vmem:[%s277 + $0x48] sm:$0xff] %v296
                %v298 = vld [vmem:[%s276 + $0xa0] sm:$0xff]
                %299 = vst [vmem:[%s277 + $0x50] sm:$0xff] %v298
                %v300 = vld [vmem:[%s276 + $0xa8] sm:$0xff]
                %301 = vst [vmem:[%s277 + $0x58] sm:$0xff] %v300
                %v302 = vld [vmem:[%s276 + $0xc0] sm:$0xff]
                %303 = vst [vmem:[%s277 + $0x60] sm:$0xff] %v302
                %v304 = vld [vmem:[%s276 + $0xc8] sm:$0xff]
                %305 = vst [vmem:[%s277 + $0x68] sm:$0xff] %v304
                %v306 = vld [vmem:[%s276 + $0xe0] sm:$0xff]
                %307 = vst [vmem:[%s277 + $0x70] sm:$0xff] %v306
                %v308 = vld [vmem:[%s276 + $0xe8] sm:$0xff]
                %309 = vst [vmem:[%s277 + $0x78] sm:$0xff] %v308
                %v310 = vld [vmem:[%s276 + $0x100] sm:$0xff]
                %311 = vst [vmem:[%s277 + $0x80] sm:$0xff] %v310
                %v312 = vld [vmem:[%s276 + $0x108] sm:$0xff]
                %313 = vst [vmem:[%s277 + $0x88] sm:$0xff] %v312
                %v314 = vld [vmem:[%s276 + $0x120] sm:$0xff]
                %315 = vst [vmem:[%s277 + $0x90] sm:$0xff] %v314
                %v316 = vld [vmem:[%s276 + $0x128] sm:$0xff]
                %317 = vst [vmem:[%s277 + $0x98] sm:$0xff] %v316
              $region78: #{tpu_custom_call.1} parent=72 // loop_footer
                %s275 = sadd.s32 1, %s271
              $region79: #{tpu_custom_call.1} parent=72 // loop_footer_branch
                %270 = sbr.rel target = $region75
              $region80: #{tpu_custom_call.1} parent=72 // loop_exit
                _
            $region73: #{tpu_custom_call.1} parent=64 // pred_fallthru
              _
          $region65: #{tpu_custom_call.1} parent=60 // pred_fallthru
            _
          %370 = vnop
        $region61: #{tpu_custom_call.1} parent=15 // pred_fallthru
          _
      $region16: #{tpu_custom_call.1} parent=5 // pred_fallthru
        _
      %p371 = scmp.le.s32.totalorder 1, %s9
      %p372 = scmp.lt.s32.totalorder %s9, 3
      %p373 = pnand %p371, %p372
      %p374 = pneg %p373
      // Predicated region
      $region96: #{tpu_custom_call.1} parent=5 // pred_check
        _
      $region97: #{tpu_custom_call.1} parent=5 // pred_check_branch
        %376 = sbr.rel (%p373) target = $region99
      $region98: #{tpu_custom_call.1} parent=5 // pred_region
        %s377 = ssub.s32 %s9, 1
        %s378 = sand.u32 %s36, 1
        %s379 = sand.u32 %s36, 1
        %s380 = smul.addr %s379, 80
        %s381 = scalar_lea.vmem [#allocation4], %s380
        // Predicated region
        $region100: #{tpu_custom_call.1} parent=98 // pred_check
          %p382 = pneg %p49
        $region101: #{tpu_custom_call.1} parent=98 // pred_check_branch
          %384 = sbr.rel (%p382) target = $region103
        $region102: #{tpu_custom_call.1} parent=98 // pred_region
          _
        $region103: #{tpu_custom_call.1} parent=98 // pred_fallthru
          _
        %s385 = sand.u32 %s64, 1
        %s386 = sand.u32 %s64, 1
        %s387 = smul.addr %s386, 160
        %s388 = scalar_lea.vmem [#allocation5], %s387
        // Predicated region
        $region104: #{tpu_custom_call.1} parent=98 // pred_check
          %p389 = pneg %p77
        $region105: #{tpu_custom_call.1} parent=98 // pred_check_branch
          %391 = sbr.rel (%p389) target = $region107
        $region106: #{tpu_custom_call.1} parent=98 // pred_region
          _
        $region107: #{tpu_custom_call.1} parent=98 // pred_fallthru
          _
        %s392 = sand.u32 %s36, 1
        %s393 = sand.u32 %s36, 1
        %s394 = smul.addr %s393, 80
        %s395 = scalar_lea.vmem [#allocation4], %s394
        %p396 = pneg %p49
        %p397 = pneg %p46
        %s398 = sand.u32 %s64, 1
        %s399 = sand.u32 %s64, 1
        %s400 = smul.addr %s399, 160
        %s401 = scalar_lea.vmem [#allocation5], %s400
        %p402 = pneg %p77
        %p403 = pneg %p74
        %p404 = pneg %p103
        %p405 = pneg %p100
        %s406 = smul.u32 10, %s18
        %s407 = smul.u32 2, %s19
        %s408 = smul.u32 10, %s18
        %s409 = smul.u32 2, %s19
        %s410 = smul.u32 2, %s18
        %p411 = scmp.eq.s32.totalorder %s19, 0
        // Predicated region
        $region108: #{tpu_custom_call.1} parent=98 // pred_check
          %p412 = pneg %p411
        $region109: #{tpu_custom_call.1} parent=98 // pred_check_branch
          %414 = sbr.rel (%p412) target = $region111
        $region110: #{tpu_custom_call.1} parent=98 // pred_region
          %vm415 = vcmask 261120
          %416 = vst.msk [vmem:[#allocation2] sm:$0xff] %vm415, 0.0
          %vm417 = vcmask 254976
          %418 = vst.msk [vmem:[#allocation2 + $0x8] sm:$0x3] %vm417, 0.0
          %vm419 = vcmask 7168
          %420 = vst.msk [vmem:[#allocation3] sm:$0xff] %vm419, 0.0
          %vm421 = vcmask 1024
          %422 = vst.msk [vmem:[#allocation3 + $0x8] sm:$0x3] %vm421, 0.0
        $region111: #{tpu_custom_call.1} parent=98 // pred_fallthru
          _
        %v423 = vld [vmem:[%s381] sm:$0xf]
        %v424 = vld [vmem:[%s381 + $0x4] sm:$0xf]
        %v425 = vld [vmem:[%s381 + $0x8] sm:$0xf]
        %v426 = vld [vmem:[%s381 + $0xc] sm:$0xf]
        %v427 = vld [vmem:[%s381 + $0x10] sm:$0xf]
        %v428 = vld [vmem:[%s381 + $0x14] sm:$0xf]
        %v429 = vld [vmem:[%s381 + $0x18] sm:$0xf]
        %v430 = vld [vmem:[%s381 + $0x1c] sm:$0xf]
        %v431 = vld [vmem:[%s381 + $0x20] sm:$0xf]
        %v432 = vld [vmem:[%s381 + $0x24] sm:$0xf]
        %v433 = vld [vmem:[%s381 + $0x28] sm:$0xf]
        %v434 = vld [vmem:[%s381 + $0x2c] sm:$0xf]
        %v435 = vld [vmem:[%s381 + $0x30] sm:$0xf]
        %v436 = vld [vmem:[%s381 + $0x34] sm:$0xf]
        %v437 = vld [vmem:[%s381 + $0x38] sm:$0xf]
        %v438 = vld [vmem:[%s381 + $0x3c] sm:$0xf]
        %v439 = vld [vmem:[%s381 + $0x40] sm:$0xf]
        %v440 = vld [vmem:[%s381 + $0x44] sm:$0xf]
        %v441 = vld [vmem:[%s381 + $0x48] sm:$0xf]
        %v442 = vld [vmem:[%s381 + $0x4c] sm:$0xf]
        %v443 = vunpack.c.l.bf16 %v423
        %v444 = vunpack.c.l.bf16 %v424
        %v445 = vunpack.c.l.bf16 %v425
        %v446 = vunpack.c.l.bf16 %v426
        %v447 = vunpack.c.l.bf16 %v427
        %v448 = vunpack.c.l.bf16 %v428
        %v449 = vunpack.c.l.bf16 %v429
        %v450 = vunpack.c.l.bf16 %v430
        %v451 = vunpack.c.l.bf16 %v431
        %v452 = vunpack.c.l.bf16 %v432
        %v453 = vunpack.c.l.bf16 %v433
        %v454 = vunpack.c.l.bf16 %v434
        %v455 = vunpack.c.l.bf16 %v435
        %v456 = vunpack.c.l.bf16 %v436
        %v457 = vunpack.c.l.bf16 %v437
        %v458 = vunpack.c.l.bf16 %v438
        %v459 = vunpack.c.l.bf16 %v439
        %v460 = vunpack.c.l.bf16 %v440
        %v461 = vunpack.c.l.bf16 %v441
        %v462 = vunpack.c.l.bf16 %v442
        %v463 = vld [vmem:[%s388] sm:$0xff]
        %v464 = vld [vmem:[%s388 + $0x8] sm:$0xff]
        %v465 = vld [vmem:[%s388 + $0x10] sm:$0xff]
        %v466 = vld [vmem:[%s388 + $0x18] sm:$0xff]
        %v467 = vld [vmem:[%s388 + $0x20] sm:$0xff]
        %v468 = vld [vmem:[%s388 + $0x28] sm:$0xff]
        %v469 = vld [vmem:[%s388 + $0x30] sm:$0xff]
        %v470 = vld [vmem:[%s388 + $0x38] sm:$0xff]
        %v471 = vld [vmem:[%s388 + $0x40] sm:$0xff]
        %v472 = vld [vmem:[%s388 + $0x48] sm:$0xff]
        %v473 = vld [vmem:[%s388 + $0x50] sm:$0xff]
        %v474 = vld [vmem:[%s388 + $0x58] sm:$0xff]
        %v475 = vld [vmem:[%s388 + $0x60] sm:$0xff]
        %v476 = vld [vmem:[%s388 + $0x68] sm:$0xff]
        %v477 = vld [vmem:[%s388 + $0x70] sm:$0xff]
        %v478 = vld [vmem:[%s388 + $0x78] sm:$0xff]
        %v479 = vld [vmem:[%s388 + $0x80] sm:$0xff]
        %v480 = vld [vmem:[%s388 + $0x88] sm:$0xff]
        %v481 = vld [vmem:[%s388 + $0x90] sm:$0xff]
        %v482 = vld [vmem:[%s388 + $0x98] sm:$0xff]
        %v483 = vcvt.s32.f32 %v463
        %v484 = vcvt.s32.f32 %v464
        %v485 = vcvt.s32.f32 %v465
        %v486 = vcvt.s32.f32 %v466
        %v487 = vcvt.s32.f32 %v467
        %v488 = vcvt.s32.f32 %v468
        %v489 = vcvt.s32.f32 %v469
        %v490 = vcvt.s32.f32 %v470
        %v491 = vcvt.s32.f32 %v471
        %v492 = vcvt.s32.f32 %v472
        %v493 = vcvt.s32.f32 %v473
        %v494 = vcvt.s32.f32 %v474
        %v495 = vcvt.s32.f32 %v475
        %v496 = vcvt.s32.f32 %v476
        %v497 = vcvt.s32.f32 %v477
        %v498 = vcvt.s32.f32 %v478
        %v499 = vcvt.s32.f32 %v479
        %v500 = vcvt.s32.f32 %v480
        %v501 = vcvt.s32.f32 %v481
        %v502 = vcvt.s32.f32 %v482
        %v503 = vld [vmem:[#allocation2] sm:$0xff]
        %v504 = vld [vmem:[#allocation2 + $0x8] sm:$0x3]
        %506 = vset.pattern.permute.xlu0 0
        %507 = vperm.xlu0 %506, %v483
        %v508 = vpop.permute.xlu0 %507
        %511 = vset.pattern.permute.xlu0 0
        %512 = vperm.xlu0 %511, %v484
        %v513 = vpop.permute.xlu0 %512
        %516 = vset.pattern.permute.xlu0 0
        %517 = vperm.xlu0 %516, %v485
        %v518 = vpop.permute.xlu0 %517
        %521 = vset.pattern.permute.xlu0 0
        %522 = vperm.xlu0 %521, %v486
        %v523 = vpop.permute.xlu0 %522
        %526 = vset.pattern.permute.xlu0 0
        %527 = vperm.xlu0 %526, %v487
        %v528 = vpop.permute.xlu0 %527
        %531 = vset.pattern.permute.xlu0 0
        %532 = vperm.xlu0 %531, %v488
        %v533 = vpop.permute.xlu0 %532
        %536 = vset.pattern.permute.xlu0 0
        %537 = vperm.xlu0 %536, %v489
        %v538 = vpop.permute.xlu0 %537
        %541 = vset.pattern.permute.xlu0 0
        %542 = vperm.xlu0 %541, %v490
        %v543 = vpop.permute.xlu0 %542
        %546 = vset.pattern.permute.xlu0 0
        %547 = vperm.xlu0 %546, %v491
        %v548 = vpop.permute.xlu0 %547
        %551 = vset.pattern.permute.xlu0 0
        %552 = vperm.xlu0 %551, %v492
        %v553 = vpop.permute.xlu0 %552
        %556 = vset.pattern.permute.xlu0 0
        %557 = vperm.xlu0 %556, %v493
        %v558 = vpop.permute.xlu0 %557
        %561 = vset.pattern.permute.xlu0 0
        %562 = vperm.xlu0 %561, %v494
        %v563 = vpop.permute.xlu0 %562
        %566 = vset.pattern.permute.xlu0 0
        %567 = vperm.xlu0 %566, %v495
        %v568 = vpop.permute.xlu0 %567
        %571 = vset.pattern.permute.xlu0 0
        %572 = vperm.xlu0 %571, %v496
        %v573 = vpop.permute.xlu0 %572
        %576 = vset.pattern.permute.xlu0 0
        %577 = vperm.xlu0 %576, %v497
        %v578 = vpop.permute.xlu0 %577
        %581 = vset.pattern.permute.xlu0 0
        %582 = vperm.xlu0 %581, %v498
        %v583 = vpop.permute.xlu0 %582
        %586 = vset.pattern.permute.xlu0 0
        %587 = vperm.xlu0 %586, %v499
        %v588 = vpop.permute.xlu0 %587
        %591 = vset.pattern.permute.xlu0 0
        %592 = vperm.xlu0 %591, %v500
        %v593 = vpop.permute.xlu0 %592
        %596 = vset.pattern.permute.xlu0 0
        %597 = vperm.xlu0 %596, %v501
        %v598 = vpop.permute.xlu0 %597
        %601 = vset.pattern.permute.xlu0 0
        %602 = vperm.xlu0 %601, %v502
        %v603 = vpop.permute.xlu0 %602
        %v605 = vmul.f32 %v443, %v508
        %v606 = vmul.f32 %v444, %v513
        %v607 = vmul.f32 %v445, %v518
        %v608 = vmul.f32 %v446, %v523
        %v609 = vmul.f32 %v447, %v528
        %v610 = vmul.f32 %v448, %v533
        %v611 = vmul.f32 %v449, %v538
        %v612 = vmul.f32 %v450, %v543
        %v613 = vmul.f32 %v451, %v548
        %v614 = vmul.f32 %v452, %v553
        %v615 = vmul.f32 %v453, %v558
        %v616 = vmul.f32 %v454, %v563
        %v617 = vmul.f32 %v455, %v568
        %v618 = vmul.f32 %v456, %v573
        %v619 = vmul.f32 %v457, %v578
        %v620 = vmul.f32 %v458, %v583
        %v621 = vmul.f32 %v459, %v588
        %v622 = vmul.f32 %v460, %v593
        %v623 = vmul.f32 %v461, %v598
        %v624 = vmul.f32 %v462, %v603
        %vm625 = vcmask 261120
        %v626 = vsel %vm625, %v605, 0.0
        %v627 = vsel %vm625, %v606, 0.0
        %v628 = vadd.f32 %v626, %v627
        %v629 = vrot.slane %v628, 4
        %v630 = vadd.f32 %v628, %v629
        %v631 = vrot.slane %v630, 2
        %v632 = vadd.f32 %v630, %v631
        %v633 = vrot.slane %v632, 1
        %v634 = vadd.f32 %v632, %v633
        %v635 = vsel %vm625, %v607, 0.0
        %v636 = vsel %vm625, %v608, 0.0
        %v637 = vadd.f32 %v635, %v636
        %v638 = vrot.slane %v637, 4
        %v639 = vadd.f32 %v637, %v638
        %v640 = vrot.slane %v639, 2
        %v641 = vadd.f32 %v639, %v640
        %v642 = vrot.slane %v641, 1
        %v643 = vadd.f32 %v641, %v642
        %v644 = vsel %vm625, %v609, 0.0
        %v645 = vsel %vm625, %v610, 0.0
        %v646 = vadd.f32 %v644, %v645
        %v647 = vrot.slane %v646, 4
        %v648 = vadd.f32 %v646, %v647
        %v649 = vrot.slane %v648, 2
        %v650 = vadd.f32 %v648, %v649
        %v651 = vrot.slane %v650, 1
        %v652 = vadd.f32 %v650, %v651
        %v653 = vsel %vm625, %v611, 0.0
        %v654 = vsel %vm625, %v612, 0.0
        %v655 = vadd.f32 %v653, %v654
        %v656 = vrot.slane %v655, 4
        %v657 = vadd.f32 %v655, %v656
        %v658 = vrot.slane %v657, 2
        %v659 = vadd.f32 %v657, %v658
        %v660 = vrot.slane %v659, 1
        %v661 = vadd.f32 %v659, %v660
        %v662 = vsel %vm625, %v613, 0.0
        %v663 = vsel %vm625, %v614, 0.0
        %v664 = vadd.f32 %v662, %v663
        %v665 = vrot.slane %v664, 4
        %v666 = vadd.f32 %v664, %v665
        %v667 = vrot.slane %v666, 2
        %v668 = vadd.f32 %v666, %v667
        %v669 = vrot.slane %v668, 1
        %v670 = vadd.f32 %v668, %v669
        %v671 = vsel %vm625, %v615, 0.0
        %v672 = vsel %vm625, %v616, 0.0
        %v673 = vadd.f32 %v671, %v672
        %v674 = vrot.slane %v673, 4
        %v675 = vadd.f32 %v673, %v674
        %v676 = vrot.slane %v675, 2
        %v677 = vadd.f32 %v675, %v676
        %v678 = vrot.slane %v677, 1
        %v679 = vadd.f32 %v677, %v678
        %v680 = vsel %vm625, %v617, 0.0
        %v681 = vsel %vm625, %v618, 0.0
        %v682 = vadd.f32 %v680, %v681
        %v683 = vrot.slane %v682, 4
        %v684 = vadd.f32 %v682, %v683
        %v685 = vrot.slane %v684, 2
        %v686 = vadd.f32 %v684, %v685
        %v687 = vrot.slane %v686, 1
        %v688 = vadd.f32 %v686, %v687
        %v689 = vsel %vm625, %v619, 0.0
        %v690 = vsel %vm625, %v620, 0.0
        %v691 = vadd.f32 %v689, %v690
        %v692 = vrot.slane %v691, 4
        %v693 = vadd.f32 %v691, %v692
        %v694 = vrot.slane %v693, 2
        %v695 = vadd.f32 %v693, %v694
        %v696 = vrot.slane %v695, 1
        %v697 = vadd.f32 %v695, %v696
        %v698 = vsel %vm625, %v621, 0.0
        %v699 = vsel %vm625, %v622, 0.0
        %v700 = vadd.f32 %v698, %v699
        %v701 = vrot.slane %v700, 4
        %v702 = vadd.f32 %v700, %v701
        %v703 = vrot.slane %v702, 2
        %v704 = vadd.f32 %v702, %v703
        %v705 = vrot.slane %v704, 1
        %v706 = vadd.f32 %v704, %v705
        %v707 = vsel %vm625, %v623, 0.0
        %v708 = vsel %vm625, %v624, 0.0
        %v709 = vadd.f32 %v707, %v708
        %v710 = vrot.slane %v709, 4
        %v711 = vadd.f32 %v709, %v710
        %v712 = vrot.slane %v711, 2
        %v713 = vadd.f32 %v711, %v712
        %v714 = vrot.slane %v713, 1
        %v715 = vadd.f32 %v713, %v714
        %vm726 = vcmask 1041409
        %v727 = vsel %vm726, %v643, %v634
        %vm728 = vcmask 1042434
        %v729 = vsel %vm728, %v652, %v727
        %vm730 = vcmask 1043459
        %v731 = vsel %vm730, %v661, %v729
        %vm732 = vcmask 1044484
        %v733 = vsel %vm732, %v670, %v731
        %vm734 = vcmask 1045509
        %v735 = vsel %vm734, %v679, %v733
        %vm736 = vcmask 1046534
        %v737 = vsel %vm736, %v688, %v735
        %vm738 = vcmask 1047559
        %v739 = vsel %vm738, %v697, %v737
        %v740 = vsel %vm726, %v715, %v706
        %v743 = vadd.f32 %v503, %v739
        %v744 = vadd.f32 %v504, %v740
        %745 = vst.msk [vmem:[#allocation2] sm:$0xff] %vm625, %v743
        %vm746 = vcmask 254976
        %747 = vst.msk [vmem:[#allocation2 + $0x8] sm:$0x3] %vm746, %v744
        %v748 = vld [vmem:[#allocation3] sm:$0xff]
        %v749 = vld [vmem:[#allocation3 + $0x8] sm:$0x3]
        %vm750 = vcmask 7168
        %v751 = vsel %vm750, %v483, 0.0
        %v752 = vsel %vm750, %v484, 0.0
        %v753 = vadd.f32 %v751, %v752
        %v754 = vrot.slane %v753, 4
        %v755 = vadd.f32 %v753, %v754
        %v756 = vrot.slane %v755, 2
        %v757 = vadd.f32 %v755, %v756
        %v758 = vrot.slane %v757, 1
        %v759 = vadd.f32 %v757, %v758
        %v760 = vsel %vm750, %v485, 0.0
        %v761 = vsel %vm750, %v486, 0.0
        %v762 = vadd.f32 %v760, %v761
        %v763 = vrot.slane %v762, 4
        %v764 = vadd.f32 %v762, %v763
        %v765 = vrot.slane %v764, 2
        %v766 = vadd.f32 %v764, %v765
        %v767 = vrot.slane %v766, 1
        %v768 = vadd.f32 %v766, %v767
        %v769 = vsel %vm750, %v487, 0.0
        %v770 = vsel %vm750, %v488, 0.0
        %v771 = vadd.f32 %v769, %v770
        %v772 = vrot.slane %v771, 4
        %v773 = vadd.f32 %v771, %v772
        %v774 = vrot.slane %v773, 2
        %v775 = vadd.f32 %v773, %v774
        %v776 = vrot.slane %v775, 1
        %v777 = vadd.f32 %v775, %v776
        %v778 = vsel %vm750, %v489, 0.0
        %v779 = vsel %vm750, %v490, 0.0
        %v780 = vadd.f32 %v778, %v779
        %v781 = vrot.slane %v780, 4
        %v782 = vadd.f32 %v780, %v781
        %v783 = vrot.slane %v782, 2
        %v784 = vadd.f32 %v782, %v783
        %v785 = vrot.slane %v784, 1
        %v786 = vadd.f32 %v784, %v785
        %v787 = vsel %vm750, %v491, 0.0
        %v788 = vsel %vm750, %v492, 0.0
        %v789 = vadd.f32 %v787, %v788
        %v790 = vrot.slane %v789, 4
        %v791 = vadd.f32 %v789, %v790
        %v792 = vrot.slane %v791, 2
        %v793 = vadd.f32 %v791, %v792
        %v794 = vrot.slane %v793, 1
        %v795 = vadd.f32 %v793, %v794
        %v796 = vsel %vm750, %v493, 0.0
        %v797 = vsel %vm750, %v494, 0.0
        %v798 = vadd.f32 %v796, %v797
        %v799 = vrot.slane %v798, 4
        %v800 = vadd.f32 %v798, %v799
        %v801 = vrot.slane %v800, 2
        %v802 = vadd.f32 %v800, %v801
        %v803 = vrot.slane %v802, 1
        %v804 = vadd.f32 %v802, %v803
        %v805 = vsel %vm750, %v495, 0.0
        %v806 = vsel %vm750, %v496, 0.0
        %v807 = vadd.f32 %v805, %v806
        %v808 = vrot.slane %v807, 4
        %v809 = vadd.f32 %v807, %v808
        %v810 = vrot.slane %v809, 2
        %v811 = vadd.f32 %v809, %v810
        %v812 = vrot.slane %v811, 1
        %v813 = vadd.f32 %v811, %v812
        %v814 = vsel %vm750, %v497, 0.0
        %v815 = vsel %vm750, %v498, 0.0
        %v816 = vadd.f32 %v814, %v815
        %v817 = vrot.slane %v816, 4
        %v818 = vadd.f32 %v816, %v817
        %v819 = vrot.slane %v818, 2
        %v820 = vadd.f32 %v818, %v819
        %v821 = vrot.slane %v820, 1
        %v822 = vadd.f32 %v820, %v821
        %v823 = vsel %vm750, %v499, 0.0
        %v824 = vsel %vm750, %v500, 0.0
        %v825 = vadd.f32 %v823, %v824
        %v826 = vrot.slane %v825, 4
        %v827 = vadd.f32 %v825, %v826
        %v828 = vrot.slane %v827, 2
        %v829 = vadd.f32 %v827, %v828
        %v830 = vrot.slane %v829, 1
        %v831 = vadd.f32 %v829, %v830
        %v832 = vsel %vm750, %v501, 0.0
        %v833 = vsel %vm750, %v502, 0.0
        %v834 = vadd.f32 %v832, %v833
        %v835 = vrot.slane %v834, 4
        %v836 = vadd.f32 %v834, %v835
        %v837 = vrot.slane %v836, 2
        %v838 = vadd.f32 %v836, %v837
        %v839 = vrot.slane %v838, 1
        %v840 = vadd.f32 %v838, %v839
        %v851 = vsel %vm726, %v768, %v759
        %v852 = vsel %vm728, %v777, %v851
        %v853 = vsel %vm730, %v786, %v852
        %v854 = vsel %vm732, %v795, %v853
        %v855 = vsel %vm734, %v804, %v854
        %v856 = vsel %vm736, %v813, %v855
        %v857 = vsel %vm738, %v822, %v856
        %v858 = vsel %vm726, %v840, %v831
        %v861 = vadd.f32 %v748, %v857
        %v862 = vadd.f32 %v749, %v858
        %863 = vst.msk [vmem:[#allocation3] sm:$0xff] %vm750, %v861
        %vm864 = vcmask 1024
        %865 = vst.msk [vmem:[#allocation3 + $0x8] sm:$0x3] %vm864, %v862
        %p866 = scmp.eq.s32.totalorder %s19, 1
        // Predicated region
        $region112: #{tpu_custom_call.1} parent=98 // pred_check
          %p867 = pneg %p866
        $region113: #{tpu_custom_call.1} parent=98 // pred_check_branch
          %869 = sbr.rel (%p867) target = $region115
        $region114: #{tpu_custom_call.1} parent=98 // pred_region
          %v870 = vld [vmem:[#allocation3] sm:$0xff]
          %v871 = vld [vmem:[#allocation3 + $0x8] sm:$0x3]
          %v872 = vmax.f32 %v870, 1.0
          %v873 = vmax.f32 %v871, 1.0
          %v874 = vld [vmem:[#allocation2] sm:$0xff]
          %v875 = vld [vmem:[#allocation2 + $0x8] sm:$0x3]
          %v876 = vrcp.pop %v872
          %v877 = vrcp.pop %v873
          %879 = vset.pattern.permute.xlu0 0
          %880 = vperm.xlu0 %879, %v876
          %v881 = vpop.permute.xlu0 %880
          %884 = vset.pattern.permute.xlu0 0
          %885 = vperm.xlu0 %884, %v877
          %v886 = vpop.permute.xlu0 %885
          %v888 = vmul.f32 %v874, %v881
          %v889 = vmul.f32 %v875, %v886
          %v890 = vmul.f32 %v888, %v888
          %v891 = vmul.f32 %v889, %v889
          %v892 = vsel %vm625, %v890, 0.0
          %893 = vadd.xlane.f32.xlu0 %v892
          %v894 = vpop.xlane.xlu0 %893
          %v895 = vsel %vm746, %v891, 0.0
          %896 = vadd.xlane.f32.xlu0 %v895
          %v897 = vpop.xlane.xlu0 %896
          %v898 = vmax.f32 %v894, 1e-24
          %v899 = vmax.f32 %v897, 1e-24
          %v900 = vrsqrt.pop %v898
          %v901 = vrsqrt.pop %v899
          %v902 = vmul.f32 %v888, %v900
          %v903 = vmul.f32 %v889, %v901
          %904 = vst.msk [vmem:[#allocation6] sm:$0xff] %vm625, %v902
          %905 = vst.msk [vmem:[#allocation6 + $0x8] sm:$0x3] %vm746, %v903
        $region115: #{tpu_custom_call.1} parent=98 // pred_fallthru
          _
        // Predicated region
        $region116: #{tpu_custom_call.1} parent=98 // pred_check
          %p906 = pneg %p100
        $region117: #{tpu_custom_call.1} parent=98 // pred_check_branch
          %908 = sbr.rel (%p906) target = $region119
        $region118: #{tpu_custom_call.1} parent=98 // pred_region
          %s909 = smul.u32 2, %s18
          %s911 = ssub.s32 256, 256
          %912 = vsyncadd [#allocation7], %s911
          %s913 = smul.addr %s909, 128
          %s914 = scalar_lea.hbm %s2, %s913
          %s915 = sshll.u32 [#allocation6], 4
          %s916 = int_to_ptr.vmem [resolvable:$true] %s915
          %921 = dma.vmem_to_hbm [thread:$0]  %s916, 256, %s914, [#allocation7], 128, 128, 8
        $region119: #{tpu_custom_call.1} parent=98 // pred_fallthru
          _
        // Predicated region
        $region120: #{tpu_custom_call.1} parent=98 // pred_check
          %p922 = pneg %p100
        $region121: #{tpu_custom_call.1} parent=98 // pred_check_branch
          %924 = sbr.rel (%p922) target = $region123
        $region122: #{tpu_custom_call.1} parent=98 // pred_region
          %925 = dma.done [#allocation7], 256
        $region123: #{tpu_custom_call.1} parent=98 // pred_fallthru
          _
      $region99: #{tpu_custom_call.1} parent=5 // pred_fallthru
        _
      %p926 = scmp.le.s32.totalorder 2, %s9
      // Predicated region
      $region124: #{tpu_custom_call.1} parent=5 // pred_check
        %p927 = pneg %p926
      $region125: #{tpu_custom_call.1} parent=5 // pred_check_branch
        %929 = sbr.rel (%p927) target = $region127
      $region126: #{tpu_custom_call.1} parent=5 // pred_region
        %s930 = ssub.s32 %s9, 2
      $region127: #{tpu_custom_call.1} parent=5 // pred_fallthru
        _
    $region6: #{tpu_custom_call.1} parent=1 // loop_footer
      %s13 = sadd.s32 1, %s9
    $region7: #{tpu_custom_call.1} parent=1 // loop_footer_branch
      %8 = sbr.rel target = $region3
    $region8: #{tpu_custom_call.1} parent=1 // loop_exit
      _
    %931 = vsyncpa [#allocation7], 1
    %s932 = scalar_lea.sflag [#allocation7], 1
    %933 = vsyncpa %s932, 1

</llo_original>
